<compile_context>
chip_gen: v5e
topology: v5e:2x2
jax: 0.10.0
libtpu: 0.0.40
codegen_flags: <defaults>
</compile_context>

<pallas_src>
import functools
import math

import jax
import jax.numpy as jnp
from jax.experimental import pallas as pl
from jax.experimental.pallas import tpu as pltpu


LANE = 128  # lane width (last-dim tile unit)


def _round_up(n, m):
    return ((n + m - 1) // m) * m


def _pad2d(a, rows, cols):
    r, c = a.shape
    if r == rows and c == cols:
        return a
    return jnp.pad(a, ((0, rows - r), (0, cols - c)))


def _vmem_budgets():
    """Per-generation budgets: generous on v5e/v6e (128 MiB VMEM), conservative
    on v7x (64 MiB per TensorCore)."""
    cap = 64 * 1024 * 1024
    try:
        info = pltpu.get_tpu_info()
        cap = int(getattr(info, "vmem_capacity_bytes", cap) or cap)
    except Exception:
        pass
    if cap >= 128 * 1024 * 1024:
        return 100 * 1024 * 1024, 80 * 1024 * 1024
    return 48 * 1024 * 1024, 40 * 1024 * 1024


VMEM_LIMIT_BYTES, FUSED_VMEM_BUDGET = _vmem_budgets()


def _sublane(dtype):
    return {4: 8, 2: 16, 1: 32}.get(jnp.dtype(dtype).itemsize, 8)


def _pick_bm(B, sub):
    # Small batch: sublane-aligned tile only (lane-density matters only on the
    # last dim).  Mid batch: 128 so the batch grid axis has >=2 "parallel"
    # steps (v7x dual-TC).  Large batch: 256 (256-deep MXU on v6e/v7x).
    if B <= 128:
        return max(_round_up(B, sub), sub)
    if B >= 1024:
        return 256
    return 128


def _pick_tile(dim_p, preferred=(512, 256, 128)):
    for t in preferred:
        if dim_p % t == 0:
            return t
    return LANE


# ---------------------------------------------------------------------------
# Fused whole-MLP kernel: one grid axis over batch tiles, all weights resident
# in VMEM (constant index maps, single-buffered), activations stay on-chip.
# ---------------------------------------------------------------------------
def _fused_mlp_kernel(*refs, n_layers):
    # refs = (x_ref, w0, b0, w1, b1, ..., o_ref)
    x_ref = refs[0]
    o_ref = refs[1 + 2 * n_layers]
    h = x_ref[...]
    for li in range(n_layers):
        w_ref = refs[1 + 2 * li]
        b_ref = refs[2 + 2 * li]          # bias is f32
        y = jnp.dot(h, w_ref[...], preferred_element_type=jnp.float32)
        y = y + b_ref[...]
        if li < n_layers - 1:
            # Intermediates live in vregs/VMEM; they never touch HBM.
            h = jnp.maximum(y, 0.0).astype(x_ref.dtype)
        else:
            o_ref[...] = y.astype(o_ref.dtype)


def _mlp_fused(xp, ws, bs, bm, out_dtype):
    Bp, in0_p = xp.shape
    n_layers = len(ws)
    outp = ws[-1].shape[1]

    def const_spec(shape):
        # Block never changes across the grid -> no double buffering needed.
        return pl.BlockSpec(shape, lambda i: (0, 0), pipeline_mode=pl.Buffered(1))

    in_specs = [pl.BlockSpec((bm, in0_p), lambda i: (i, 0))]
    args = [xp]
    flops = 0
    bytes_accessed = (xp.size * xp.dtype.itemsize
                      + Bp * outp * jnp.dtype(out_dtype).itemsize)
    for w, b in zip(ws, bs):
        kin, kout = w.shape
        in_specs.append(const_spec((kin, kout)))
        in_specs.append(const_spec((1, kout)))
        args += [w, b]
        flops += 2 * Bp * kin * kout
        bytes_accessed += w.size * w.dtype.itemsize + b.size * b.dtype.itemsize

    return pl.pallas_call(
        functools.partial(_fused_mlp_kernel, n_layers=n_layers),
        out_shape=jax.ShapeDtypeStruct((Bp, outp), out_dtype),
        grid_spec=pltpu.PrefetchScalarGridSpec(
            num_scalar_prefetch=0,
            grid=(Bp // bm,),
            in_specs=in_specs,
            out_specs=pl.BlockSpec((bm, outp), lambda i: (i, 0)),
        ),
        compiler_params=pltpu.CompilerParams(
            dimension_semantics=("parallel",),
            vmem_limit_bytes=VMEM_LIMIT_BYTES,
        ),
        cost_estimate=pl.CostEstimate(
            flops=flops, transcendentals=0, bytes_accessed=bytes_accessed),
    )(*args)


# ---------------------------------------------------------------------------
# Fallback: per-layer M/N/K-tiled linear (+bias, +optional ReLU) kernel.
# ---------------------------------------------------------------------------
def _linear_tiled_kernel(x_ref, w_ref, b_ref, o_ref, acc_ref, *, apply_relu):
    @pl.when(pl.program_id(2) == 0)
    def _():
        acc_ref[...] = jnp.zeros_like(acc_ref)

    acc_ref[...] += jnp.dot(x_ref[...], w_ref[...],
                            preferred_element_type=jnp.float32)

    @pl.when(pl.program_id(2) == pl.num_programs(2) - 1)
    def _():
        y = acc_ref[...] + b_ref[...]     # bias is f32
        if apply_relu:
            y = jnp.maximum(y, 0.0)
        o_ref[...] = y.astype(o_ref.dtype)


def _linear_tiled(xp, wp, bp, *, apply_relu, bm, out_dtype):
    Bp, Kp = xp.shape
    Np = wp.shape[1]
    bn = _pick_tile(Np)
    bk = _pick_tile(Kp)

    return pl.pallas_call(
        functools.partial(_linear_tiled_kernel, apply_relu=apply_relu),
        out_shape=jax.ShapeDtypeStruct((Bp, Np), out_dtype),
        grid_spec=pltpu.PrefetchScalarGridSpec(
            num_scalar_prefetch=0,
            grid=(Bp // bm, Np // bn, Kp // bk),
            in_specs=[
                pl.BlockSpec((bm, bk), lambda i, j, k: (i, k)),   # x tile
                pl.BlockSpec((bk, bn), lambda i, j, k: (k, j)),   # weight tile
                pl.BlockSpec((1, bn), lambda i, j, k: (0, j)),    # bias tile
            ],
            out_specs=pl.BlockSpec((bm, bn), lambda i, j, k: (i, j)),
            scratch_shapes=[pltpu.VMEM((bm, bn), jnp.float32)],
        ),
        compiler_params=pltpu.CompilerParams(
            dimension_semantics=("parallel", "parallel", "arbitrary"),
            vmem_limit_bytes=VMEM_LIMIT_BYTES,
        ),
        cost_estimate=pl.CostEstimate(
            flops=2 * Bp * Kp * Np,
            transcendentals=0,
            bytes_accessed=(xp.size * xp.dtype.itemsize
                            + wp.size * wp.dtype.itemsize
                            + bp.size * bp.dtype.itemsize
                            + Bp * Np * jnp.dtype(out_dtype).itemsize)),
    )(xp, wp, bp)


# ---------------------------------------------------------------------------
# Parameter init (matches torch.nn.Linear default range) and forward builders.
# ---------------------------------------------------------------------------
def init_mlp_params(key, ninput, nh, noutput, nlayers, dtype=jnp.float32):
    """Weights stored as [in, out] (i.e. torch W.T)."""
    dims = ([(ninput, noutput)] if nlayers == 1
            else [(ninput, nh)] + [(nh, nh)] * (nlayers - 2) + [(nh, noutput)])
    params = []
    for fan_in, fan_out in dims:
        key, kw, kb = jax.random.split(key, 3)
        bound = 1.0 / math.sqrt(fan_in)
        w = jax.random.uniform(kw, (fan_in, fan_out), dtype, -bound, bound)
        b = jax.random.uniform(kb, (fan_out,), dtype, -bound, bound)
        params.append((w, b))
    return params


def build_mlp_forward(params, *, compute_dtype=jnp.bfloat16, force_layered=False):
    """Pad/cast the weight stack ONCE and statically decide fused vs. layered
    from the per-generation VMEM budget.  Returns a cleanly-jittable
    forward(x) closure (no host syncs, no try/except)."""
    n_layers = len(params)
    noutput = params[-1][0].shape[1]
    compute_dtype = jnp.dtype(compute_dtype)

    # Feature-dim chain: [in0, out_0, out_1, ..., out_last].
    dims = [params[0][0].shape[0]] + [w.shape[1] for w, _ in params]
    dims128 = [_round_up(d, LANE) for d in dims]

    # Static fused-fit estimate (weights/biases resident + double-buffered
    # in/out batch tiles + live f32 intermediates), with the largest bm.
    bm_max = 256
    param_bytes = sum(dims128[i] * dims128[i + 1] * compute_dtype.itemsize
                      + dims128[i + 1] * 4 for i in range(n_layers))
    act_bytes = 2 * bm_max * (dims128[0] + dims128[-1]) * compute_dtype.itemsize
    act_bytes += 2 * bm_max * max(dims128) * 4
    fused = (not force_layered) and (param_bytes + act_bytes <= FUSED_VMEM_BUDGET)

    # Pad ONCE.  Fused: 128-lane alignment (keep resident weights small).
    # Layered: reduction (K) dims to 256 so bk/bn >= 256 (256-deep MXU, fewer
    # K grid steps); final pure-output dim stays at 128.  Zero padding exact.
    if fused:
        pad_dims = dims128
    else:
        pad_dims = [_round_up(d, 256) for d in dims[:-1]] + [dims128[-1]]

    ws, bs = [], []
    for i, (w, b) in enumerate(params):
        kin_p, kout_p = pad_dims[i], pad_dims[i + 1]
        ws.append(_pad2d(w, kin_p, kout_p).astype(compute_dtype))
        bs.append(_pad2d(b.reshape(1, -1).astype(jnp.float32), 1, kout_p))
    ws, bs = tuple(ws), tuple(bs)
    in0_p = pad_dims[0]
    sub = _sublane(compute_dtype)

    # TODO(synk): add a weight-streaming middle path (activations resident in
    # VMEM, weights pipelined from HBM via pltpu.emit_pipeline) for stacks that
    # overflow the fused budget -- most valuable on v7x's 64 MiB VMEM.

    def forward(x):
        B = x.shape[0]
        out_dtype = x.dtype
        bm = _pick_bm(B, sub)
        Bp = _round_up(B, bm)
        xp = _pad2d(x, Bp, in0_p).astype(compute_dtype)
        if fused:
            out = _mlp_fused(xp, ws, bs, bm, out_dtype)
        else:
            h = xp
            for i in range(n_layers):
                last = (i == n_layers - 1)
                h = _linear_tiled(h, ws[i], bs[i], apply_relu=not last, bm=bm,
                                  out_dtype=out_dtype if last else compute_dtype)
            out = h
        return out[:B, :noutput]

    return forward


def mlp_forward_ref(x, params):
    h = x
    for i, (w, b) in enumerate(params):
        h = h @ w + b
        if i != len(params) - 1:
            h = jnp.maximum(h, 0.0)
    return h


if __name__ == "__main__":
    key = jax.random.PRNGKey(0)
    ninput, nh, noutput, nlayers = 16, 32, 8, 3
    batch = 10  # deliberately not a multiple of any tile size

    key, kx = jax.random.split(key)
    x = jax.random.normal(kx, (batch, ninput), jnp.float32)
    params = init_mlp_params(key, ninput, nh, noutput, nlayers)

    y_ref = mlp_forward_ref(x, params)

    # Fused single-kernel path, f32 operands (tight tolerance), under jit.
    fwd_f32 = jax.jit(build_mlp_forward(params, compute_dtype=jnp.float32))
    y = jax.block_until_ready(fwd_f32(x))
    assert y.shape == (batch, noutput)
    assert jnp.allclose(y, y_ref, atol=1e-5, rtol=1e-5)

    # Fused path with bf16 operands / f32 accumulation (MXU-native on v6e/v7x).
    fwd_bf16 = jax.jit(build_mlp_forward(params, compute_dtype=jnp.bfloat16))
    y_bf16 = jax.block_until_ready(fwd_bf16(x))
    assert jnp.allclose(y_bf16, y_ref, atol=5e-2, rtol=5e-2)

    # Tiled per-layer path (the large-model fallback) must also be correct.
    fwd_layered = jax.jit(build_mlp_forward(params, compute_dtype=jnp.float32,
                                            force_layered=True))
    y2 = jax.block_until_ready(fwd_layered(x))
    assert jnp.allclose(y2, y_ref, atol=1e-5, rtol=1e-5)

    print("KERNEL_OK")
</pallas_src>

<mosaic_0001>
module attributes {stable_mosaic.version = 11 : i64} {
  func.func @_fused_mlp_kernel(%arg0: i32, %arg1: memref<16x128xf32, #tpu.memory_space<vmem>>, %arg2: memref<128x128xf32, #tpu.memory_space<vmem>>, %arg3: memref<1x128xf32, #tpu.memory_space<vmem>>, %arg4: memref<128x128xf32, #tpu.memory_space<vmem>>, %arg5: memref<1x128xf32, #tpu.memory_space<vmem>>, %arg6: memref<128x128xf32, #tpu.memory_space<vmem>>, %arg7: memref<1x128xf32, #tpu.memory_space<vmem>>, %arg8: memref<16x128xf32, #tpu.memory_space<vmem>>) attributes {dimension_semantics = [#tpu.dimension_semantics<parallel>], iteration_bounds = array<i64: 1>, scalar_prefetch = 0 : i64, scratch_operands = 0 : i64, tpu.core_type = #tpu.core_type<tc>, window_params = [{transform_indices = @transform_0, window_bounds = array<i64: 16, 128>}, {pipeline_mode = #tpu.pipeline_mode<synchronous>, transform_indices = @transform_1, window_bounds = array<i64: 128, 128>}, {pipeline_mode = #tpu.pipeline_mode<synchronous>, transform_indices = @transform_2, window_bounds = array<i64: 1, 128>}, {pipeline_mode = #tpu.pipeline_mode<synchronous>, transform_indices = @transform_3, window_bounds = array<i64: 128, 128>}, {pipeline_mode = #tpu.pipeline_mode<synchronous>, transform_indices = @transform_4, window_bounds = array<i64: 1, 128>}, {pipeline_mode = #tpu.pipeline_mode<synchronous>, transform_indices = @transform_5, window_bounds = array<i64: 128, 128>}, {pipeline_mode = #tpu.pipeline_mode<synchronous>, transform_indices = @transform_6, window_bounds = array<i64: 1, 128>}, {transform_indices = @transform_7, window_bounds = array<i64: 16, 128>}]} {
    %c0 = arith.constant 0 : index
    %c0_0 = arith.constant 0 : index
    %0 = vector.load %arg1[%c0, %c0_0] : memref<16x128xf32, #tpu.memory_space<vmem>>, vector<16x128xf32>
    %c0_1 = arith.constant 0 : index
    %c0_2 = arith.constant 0 : index
    %1 = vector.load %arg2[%c0_1, %c0_2] : memref<128x128xf32, #tpu.memory_space<vmem>>, vector<128x128xf32>
    %cst = arith.constant dense<0.000000e+00> : vector<16x128xf32>
    %2 = tpu.matmul %0, %1, %cst {dimension_numbers = #tpu.dot_dimension_numbers<[1], [0], [0], [1], [0, 0, 1, 1], [], []>} : vector<16x128xf32>, vector<128x128xf32>, vector<16x128xf32> -> vector<16x128xf32>
    %c0_3 = arith.constant 0 : index
    %c0_4 = arith.constant 0 : index
    %3 = vector.load %arg3[%c0_3, %c0_4] : memref<1x128xf32, #tpu.memory_space<vmem>>, vector<1x128xf32>
    %4 = vector.broadcast %3 : vector<1x128xf32> to vector<16x128xf32>
    %5 = arith.addf %2, %4 : vector<16x128xf32>
    %cst_5 = arith.constant 0.000000e+00 : f32
    %6 = vector.broadcast %cst_5 : f32 to vector<16x128xf32>
    %7 = arith.maximumf %5, %6 : vector<16x128xf32>
    %c0_6 = arith.constant 0 : index
    %c0_7 = arith.constant 0 : index
    %8 = vector.load %arg4[%c0_6, %c0_7] : memref<128x128xf32, #tpu.memory_space<vmem>>, vector<128x128xf32>
    %cst_8 = arith.constant dense<0.000000e+00> : vector<16x128xf32>
    %9 = tpu.matmul %7, %8, %cst_8 {dimension_numbers = #tpu.dot_dimension_numbers<[1], [0], [0], [1], [0, 0, 1, 1], [], []>} : vector<16x128xf32>, vector<128x128xf32>, vector<16x128xf32> -> vector<16x128xf32>
    %c0_9 = arith.constant 0 : index
    %c0_10 = arith.constant 0 : index
    %10 = vector.load %arg5[%c0_9, %c0_10] : memref<1x128xf32, #tpu.memory_space<vmem>>, vector<1x128xf32>
    %11 = vector.broadcast %10 : vector<1x128xf32> to vector<16x128xf32>
    %12 = arith.addf %9, %11 : vector<16x128xf32>
    %cst_11 = arith.constant 0.000000e+00 : f32
    %13 = vector.broadcast %cst_11 : f32 to vector<16x128xf32>
    %14 = arith.maximumf %12, %13 : vector<16x128xf32>
    %c0_12 = arith.constant 0 : index
    %c0_13 = arith.constant 0 : index
    %15 = vector.load %arg6[%c0_12, %c0_13] : memref<128x128xf32, #tpu.memory_space<vmem>>, vector<128x128xf32>
    %cst_14 = arith.constant dense<0.000000e+00> : vector<16x128xf32>
    %16 = tpu.matmul %14, %15, %cst_14 {dimension_numbers = #tpu.dot_dimension_numbers<[1], [0], [0], [1], [0, 0, 1, 1], [], []>} : vector<16x128xf32>, vector<128x128xf32>, vector<16x128xf32> -> vector<16x128xf32>
    %c0_15 = arith.constant 0 : index
    %c0_16 = arith.constant 0 : index
    %17 = vector.load %arg7[%c0_15, %c0_16] : memref<1x128xf32, #tpu.memory_space<vmem>>, vector<1x128xf32>
    %18 = vector.broadcast %17 : vector<1x128xf32> to vector<16x128xf32>
    %19 = arith.addf %16, %18 : vector<16x128xf32>
    %c0_17 = arith.constant 0 : index
    %c0_18 = arith.constant 0 : index
    %20 = vector.load %arg8[%c0_17, %c0_18] : memref<16x128xf32, #tpu.memory_space<vmem>>, vector<16x128xf32>
    tpu.vector_store %arg8[%c0_17, %c0_18], %19 {strides = array<i32>} : memref<16x128xf32, #tpu.memory_space<vmem>>, vector<16x128xf32>,
    return
  }
  func.func @transform_0(%arg0: i32) -> (i32, i32) {
    %c0_i32 = arith.constant 0 : i32
    %c0_i32_0 = arith.constant 0 : i32
    return %arg0, %c0_i32 : i32, i32
  }
  func.func @transform_1(%arg0: i32) -> (i32, i32) {
    %c0_i32 = arith.constant 0 : i32
    %c0_i32_0 = arith.constant 0 : i32
    %c0_i32_1 = arith.constant 0 : i32
    return %c0_i32, %c0_i32_0 : i32, i32
  }
  func.func @transform_2(%arg0: i32) -> (i32, i32) {
    %c0_i32 = arith.constant 0 : i32
    %c0_i32_0 = arith.constant 0 : i32
    %c0_i32_1 = arith.constant 0 : i32
    return %c0_i32, %c0_i32_0 : i32, i32
  }
  func.func @transform_3(%arg0: i32) -> (i32, i32) {
    %c0_i32 = arith.constant 0 : i32
    %c0_i32_0 = arith.constant 0 : i32
    %c0_i32_1 = arith.constant 0 : i32
    return %c0_i32, %c0_i32_0 : i32, i32
  }
  func.func @transform_4(%arg0: i32) -> (i32, i32) {
    %c0_i32 = arith.constant 0 : i32
    %c0_i32_0 = arith.constant 0 : i32
    %c0_i32_1 = arith.constant 0 : i32
    return %c0_i32, %c0_i32_0 : i32, i32
  }
  func.func @transform_5(%arg0: i32) -> (i32, i32) {
    %c0_i32 = arith.constant 0 : i32
    %c0_i32_0 = arith.constant 0 : i32
    %c0_i32_1 = arith.constant 0 : i32
    return %c0_i32, %c0_i32_0 : i32, i32
  }
  func.func @transform_6(%arg0: i32) -> (i32, i32) {
    %c0_i32 = arith.constant 0 : i32
    %c0_i32_0 = arith.constant 0 : i32
    %c0_i32_1 = arith.constant 0 : i32
    return %c0_i32, %c0_i32_0 : i32, i32
  }
  func.func @transform_7(%arg0: i32) -> (i32, i32) {
    %c0_i32 = arith.constant 0 : i32
    %c0_i32_0 = arith.constant 0 : i32
    return %arg0, %c0_i32 : i32, i32
  }
}

</mosaic_0001>

<llo_original>
// kernel: forward.1
$region0: #{forward.1}
  #allocation0 [shape = 'u32[]', space=smem, size = 0x4, offset = 0x4, fixed_abs, tag = 'smem constant byte address 0x4 - core index']
  #allocation1 [shape = 'u32[72,128]{1,0:T(1,128)}', space=vmem, size = 0x9000, scoped, tag = 'internal scratch']
  %s0 = inlined_call_operand.vmem [shape: f32[16,128], index: 0, kind: input, shape index: {}]
  %s1 = inlined_call_operand.hbm [shape: f32[128,128], index: 1, kind: input, shape index: {}]
  %s2 = inlined_call_operand.vmem [shape: f32[1,128], index: 2, kind: input, shape index: {}]
  %s3 = inlined_call_operand.hbm [shape: f32[128,128], index: 3, kind: input, shape index: {}]
  %s4 = inlined_call_operand.vmem [shape: f32[1,128], index: 4, kind: input, shape index: {}]
  %s5 = inlined_call_operand.hbm [shape: f32[128,128], index: 5, kind: input, shape index: {}]
  %s6 = inlined_call_operand.vmem [shape: f32[1,128], index: 6, kind: input, shape index: {}]
  %s7 = inlined_call_operand.vmem [shape: f32[16,128], index: 7, kind: output, shape index: {}]
  %s8 = sld [smem:[#allocation0]]
  $region50: #{forward.1} parent=0
    _
  %s10 = ssub.s32 1, %s8
  %s11 = scalar_select 0, %s10, %s8
  $region1: #{forward.1} parent=0
    #allocation2 [shape = 'u8[65536]{0}', space=vmem, size = 0x10000, scoped, tag = 'input window, operand 1, single buffered']
    #allocation3 [shape = 's32[1]{0}', space=sflag, size = 0x4, scoped, tag = 'scoped memory for forward.1']
    #allocation4 [shape = 'u8[65536]{0}', space=vmem, size = 0x10000, scoped, tag = 'input window, operand 3, single buffered']
    #allocation5 [shape = 's32[1]{0}', space=sflag, size = 0x4, scoped, tag = 'scoped memory for forward.1']
    #allocation6 [shape = 'u8[65536]{0}', space=vmem, size = 0x10000, scoped, tag = 'input window, operand 5, single buffered']
    %12 = vsyncpa [#allocation3], 0
    %13 = vsyncpa [#allocation5], 0
    // Predicated region
    $region2: #{forward.1} parent=1 // pred_check
      _
    $region3: #{forward.1} parent=1 // pred_check_branch
      %15 = sbr.rel (0) target = $region5
    $region4: #{forward.1} parent=1 // pred_region
      _
    $region5: #{forward.1} parent=1 // pred_fallthru
      _
    // Predicated region
    $region6: #{forward.1} parent=1 // pred_check
      _
    $region7: #{forward.1} parent=1 // pred_check_branch
      %17 = sbr.rel (0) target = $region9
    $region8: #{forward.1} parent=1 // pred_region
      %19 = vsyncadd [#allocation3], 0
      %s20 = sshll.u32 %s1, 4
      %s21 = int_to_ptr.hbm [resolvable:$true] %s20
      %s22 = sshll.u32 [#allocation2], 4
      %s23 = int_to_ptr.vmem [resolvable:$true] %s22
      %28 = dma.hbm_to_vmem [thread:$0]  %s21, 2048, %s23, [#allocation3], 128, 128, 8
    $region9: #{forward.1} parent=1 // pred_fallthru
      _
    // Predicated region
    $region10: #{forward.1} parent=1 // pred_check
      _
    $region11: #{forward.1} parent=1 // pred_check_branch
      %30 = sbr.rel (0) target = $region13
    $region12: #{forward.1} parent=1 // pred_region
      _
    $region13: #{forward.1} parent=1 // pred_fallthru
      _
    // Predicated region
    $region14: #{forward.1} parent=1 // pred_check
      _
    $region15: #{forward.1} parent=1 // pred_check_branch
      %32 = sbr.rel (0) target = $region17
    $region16: #{forward.1} parent=1 // pred_region
      %34 = vsyncadd [#allocation5], 0
      %s35 = sshll.u32 %s3, 4
      %s36 = int_to_ptr.hbm [resolvable:$true] %s35
      %s37 = sshll.u32 [#allocation4], 4
      %s38 = int_to_ptr.vmem [resolvable:$true] %s37
      %43 = dma.hbm_to_vmem [thread:$0]  %s36, 2048, %s38, [#allocation5], 128, 128, 8
    $region17: #{forward.1} parent=1 // pred_fallthru
      _
    // Predicated region
    $region18: #{forward.1} parent=1 // pred_check
      _
    $region19: #{forward.1} parent=1 // pred_check_branch
      %45 = sbr.rel (0) target = $region21
    $region20: #{forward.1} parent=1 // pred_region
      _
    $region21: #{forward.1} parent=1 // pred_fallthru
      _
    // Predicated region
    $region22: #{forward.1} parent=1 // pred_check
      _
    $region23: #{forward.1} parent=1 // pred_check_branch
      %47 = sbr.rel (0) target = $region25
    $region24: #{forward.1} parent=1 // pred_region
      %49 = vsyncadd [#allocation5], 0
      %s50 = sshll.u32 %s5, 4
      %s51 = int_to_ptr.hbm [resolvable:$true] %s50
      %s52 = sshll.u32 [#allocation6], 4
      %s53 = int_to_ptr.vmem [resolvable:$true] %s52
      %58 = dma.hbm_to_vmem [thread:$0]  %s51, 2048, %s53, [#allocation5], 128, 128, 8
    $region25: #{forward.1} parent=1 // pred_fallthru
      _
    // Predicated region
    $region26: #{forward.1} parent=1 // pred_check
      _
    $region27: #{forward.1} parent=1 // pred_check_branch
      %60 = sbr.rel (0) target = $region29
    $region28: #{forward.1} parent=1 // pred_region
      _
    $region29: #{forward.1} parent=1 // pred_fallthru
      _
    // Predicated region
    $region30: #{forward.1} parent=1 // pred_check
      _
    $region31: #{forward.1} parent=1 // pred_check_branch
      %62 = sbr.rel (0) target = $region33
    $region32: #{forward.1} parent=1 // pred_region
      %64 = dma.done [#allocation3], 2048
    $region33: #{forward.1} parent=1 // pred_fallthru
      _
    // Predicated region
    $region34: #{forward.1} parent=1 // pred_check
      _
    $region35: #{forward.1} parent=1 // pred_check_branch
      %66 = sbr.rel (0) target = $region37
    $region36: #{forward.1} parent=1 // pred_region
      %68 = dma.done [#allocation5], 2048
    $region37: #{forward.1} parent=1 // pred_fallthru
      _
    // Predicated region
    $region38: #{forward.1} parent=1 // pred_check
      _
    $region39: #{forward.1} parent=1 // pred_check_branch
      %70 = sbr.rel (0) target = $region41
    $region40: #{forward.1} parent=1 // pred_region
      %72 = dma.done [#allocation5], 2048
    $region41: #{forward.1} parent=1 // pred_fallthru
      _
    %v73 = vld [vmem:[%s0] sm:$0xff]
    %v74 = vld [vmem:[%s0 + $0x8] sm:$0xff]
    %v75 = vld [vmem:[#allocation2] sm:$0xff]
    %v76 = vld [vmem:[#allocation2 + $0x8] sm:$0xff]
    %v77 = vld [vmem:[#allocation2 + $0x10] sm:$0xff]
    %v78 = vld [vmem:[#allocation2 + $0x18] sm:$0xff]
    %v79 = vld [vmem:[#allocation2 + $0x20] sm:$0xff]
    %v80 = vld [vmem:[#allocation2 + $0x28] sm:$0xff]
    %v81 = vld [vmem:[#allocation2 + $0x30] sm:$0xff]
    %v82 = vld [vmem:[#allocation2 + $0x38] sm:$0xff]
    %v83 = vld [vmem:[#allocation2 + $0x40] sm:$0xff]
    %v84 = vld [vmem:[#allocation2 + $0x48] sm:$0xff]
    %v85 = vld [vmem:[#allocation2 + $0x50] sm:$0xff]
    %v86 = vld [vmem:[#allocation2 + $0x58] sm:$0xff]
    %v87 = vld [vmem:[#allocation2 + $0x60] sm:$0xff]
    %v88 = vld [vmem:[#allocation2 + $0x68] sm:$0xff]
    %v89 = vld [vmem:[#allocation2 + $0x70] sm:$0xff]
    %v90 = vld [vmem:[#allocation2 + $0x78] sm:$0xff]
    %v91 = vld [vmem:[%s2] sm:$0x1]
    %v93 = vperm.slane %v91, 0
    %95 = vmatpush.msra.mxu0 %v90
    %96 = vmatpush.msra.mxu0 %v89
    %97 = vmatpush.msra.mxu0 %v88
    %98 = vmatpush.msra.mxu0 %v87
    %99 = vmatpush.msra.mxu0 %v86
    %100 = vmatpush.msra.mxu0 %v85
    %101 = vmatpush.msra.mxu0 %v84
    %102 = vmatpush.msra.mxu0 %v83
    %103 = vmatpush.msra.mxu0 %v82
    %104 = vmatpush.msra.mxu0 %v81
    %105 = vmatpush.msra.mxu0 %v80
    %106 = vmatpush.msra.mxu0 %v79
    %107 = vmatpush.msra.mxu0 %v78
    %108 = vmatpush.msra.mxu0 %v77
    %109 = vmatpush.msra.mxu0 %v76
    %110 = vmatpush.msra.mxu0 %v75
    %111 = vmatmul.f32.gmra.mxu0 %v73
    %v112 = vpop.f32.mrf.mxu0
    %v113 = vadd.f32 %v93, %v112
    %114 = vmatmul.f32.gmra.mxu0 %v74
    %v115 = vpop.f32.mrf.mxu0
    %v116 = vadd.f32 %v93, %v115
    %117 = vdwg.mxu0
    %v118 = vmax.f32 %v113, 0.0
    %v119 = vmax.f32 %v116, 0.0
    %v120 = vld [vmem:[#allocation4] sm:$0xff]
    %v121 = vld [vmem:[#allocation4 + $0x8] sm:$0xff]
    %v122 = vld [vmem:[#allocation4 + $0x10] sm:$0xff]
    %v123 = vld [vmem:[#allocation4 + $0x18] sm:$0xff]
    %v124 = vld [vmem:[#allocation4 + $0x20] sm:$0xff]
    %v125 = vld [vmem:[#allocation4 + $0x28] sm:$0xff]
    %v126 = vld [vmem:[#allocation4 + $0x30] sm:$0xff]
    %v127 = vld [vmem:[#allocation4 + $0x38] sm:$0xff]
    %v128 = vld [vmem:[#allocation4 + $0x40] sm:$0xff]
    %v129 = vld [vmem:[#allocation4 + $0x48] sm:$0xff]
    %v130 = vld [vmem:[#allocation4 + $0x50] sm:$0xff]
    %v131 = vld [vmem:[#allocation4 + $0x58] sm:$0xff]
    %v132 = vld [vmem:[#allocation4 + $0x60] sm:$0xff]
    %v133 = vld [vmem:[#allocation4 + $0x68] sm:$0xff]
    %v134 = vld [vmem:[#allocation4 + $0x70] sm:$0xff]
    %v135 = vld [vmem:[#allocation4 + $0x78] sm:$0xff]
    %v136 = vld [vmem:[%s4] sm:$0x1]
    %v138 = vperm.slane %v136, 0
    %140 = vmatpush.msra.mxu0 %v135
    %141 = vmatpush.msra.mxu0 %v134
    %142 = vmatpush.msra.mxu0 %v133
    %143 = vmatpush.msra.mxu0 %v132
    %144 = vmatpush.msra.mxu0 %v131
    %145 = vmatpush.msra.mxu0 %v130
    %146 = vmatpush.msra.mxu0 %v129
    %147 = vmatpush.msra.mxu0 %v128
    %148 = vmatpush.msra.mxu0 %v127
    %149 = vmatpush.msra.mxu0 %v126
    %150 = vmatpush.msra.mxu0 %v125
    %151 = vmatpush.msra.mxu0 %v124
    %152 = vmatpush.msra.mxu0 %v123
    %153 = vmatpush.msra.mxu0 %v122
    %154 = vmatpush.msra.mxu0 %v121
    %155 = vmatpush.msra.mxu0 %v120
    %156 = vmatmul.f32.gmra.mxu0 %v118
    %v157 = vpop.f32.mrf.mxu0
    %v158 = vadd.f32 %v138, %v157
    %159 = vmatmul.f32.gmra.mxu0 %v119
    %v160 = vpop.f32.mrf.mxu0
    %v161 = vadd.f32 %v138, %v160
    %162 = vdwg.mxu0
    %v163 = vmax.f32 %v158, 0.0
    %v164 = vmax.f32 %v161, 0.0
    %v165 = vld [vmem:[#allocation6] sm:$0xff]
    %v166 = vld [vmem:[#allocation6 + $0x8] sm:$0xff]
    %v167 = vld [vmem:[#allocation6 + $0x10] sm:$0xff]
    %v168 = vld [vmem:[#allocation6 + $0x18] sm:$0xff]
    %v169 = vld [vmem:[#allocation6 + $0x20] sm:$0xff]
    %v170 = vld [vmem:[#allocation6 + $0x28] sm:$0xff]
    %v171 = vld [vmem:[#allocation6 + $0x30] sm:$0xff]
    %v172 = vld [vmem:[#allocation6 + $0x38] sm:$0xff]
    %v173 = vld [vmem:[#allocation6 + $0x40] sm:$0xff]
    %v174 = vld [vmem:[#allocation6 + $0x48] sm:$0xff]
    %v175 = vld [vmem:[#allocation6 + $0x50] sm:$0xff]
    %v176 = vld [vmem:[#allocation6 + $0x58] sm:$0xff]
    %v177 = vld [vmem:[#allocation6 + $0x60] sm:$0xff]
    %v178 = vld [vmem:[#allocation6 + $0x68] sm:$0xff]
    %v179 = vld [vmem:[#allocation6 + $0x70] sm:$0xff]
    %v180 = vld [vmem:[#allocation6 + $0x78] sm:$0xff]
    %v181 = vld [vmem:[%s6] sm:$0x1]
    %v183 = vperm.slane %v181, 0
    %185 = vmatpush.msra.mxu0 %v180
    %186 = vmatpush.msra.mxu0 %v179
    %187 = vmatpush.msra.mxu0 %v178
    %188 = vmatpush.msra.mxu0 %v177
    %189 = vmatpush.msra.mxu0 %v176
    %190 = vmatpush.msra.mxu0 %v175
    %191 = vmatpush.msra.mxu0 %v174
    %192 = vmatpush.msra.mxu0 %v173
    %193 = vmatpush.msra.mxu0 %v172
    %194 = vmatpush.msra.mxu0 %v171
    %195 = vmatpush.msra.mxu0 %v170
    %196 = vmatpush.msra.mxu0 %v169
    %197 = vmatpush.msra.mxu0 %v168
    %198 = vmatpush.msra.mxu0 %v167
    %199 = vmatpush.msra.mxu0 %v166
    %200 = vmatpush.msra.mxu0 %v165
    %201 = vmatmul.f32.gmra.mxu0 %v163
    %v202 = vpop.f32.mrf.mxu0
    %v203 = vadd.f32 %v183, %v202
    %204 = vmatmul.f32.gmra.mxu0 %v164
    %v205 = vpop.f32.mrf.mxu0
    %v206 = vadd.f32 %v183, %v205
    %207 = vdwg.mxu0
    %208 = vst [vmem:[%s7] sm:$0xff] %v203
    %209 = vst [vmem:[%s7 + $0x8] sm:$0xff] %v206
    // Predicated region
    $region42: #{forward.1} parent=1 // pred_check
      _
    $region43: #{forward.1} parent=1 // pred_check_branch
      %211 = sbr.rel (0) target = $region45
    $region44: #{forward.1} parent=1 // pred_region
      _
    $region45: #{forward.1} parent=1 // pred_fallthru
      _
    // Predicated region
    $region46: #{forward.1} parent=1 // pred_check
      _
    $region47: #{forward.1} parent=1 // pred_check_branch
      %213 = sbr.rel (0) target = $region49
    $region48: #{forward.1} parent=1 // pred_region
      _
    $region49: #{forward.1} parent=1 // pred_fallthru
      _
    %214 = vsyncpa [#allocation3], 1
    %215 = vsyncpa [#allocation5], 1

</llo_original>
